<compile_context>
chip_gen: v7x
topology: tpu7x:2x2x1
jax: 0.10.0
libtpu: 0.0.40
codegen_flags: <defaults>
</compile_context>

<pallas_src>
from functools import partial

import jax
import jax.numpy as jnp
from jax.experimental import pallas as pl
from jax.experimental.pallas import tpu as pltpu


def _round_up(x, m):
    return (x + m - 1) // m * m


# ---------------------------------------------------------------------------
# Kernel
# ---------------------------------------------------------------------------
def _bert_vit_kernel(texts_ref, wt_ref, bt_ref, wc1_ref, bc1_ref, wc2_ref, bc2_ref,
                     out_ref, *, out_size):
    b_tile, T, Dt = texts_ref.shape
    O_aug = wt_ref.shape[1]

    # Text projection (+ fused token_score in column `out_size`): bf16 MXU, f32 accumulate.
    x = texts_ref[...].reshape(b_tile * T, Dt)                    # bf16 (b*T, Dt)
    proj = jnp.dot(x, wt_ref[...], preferred_element_type=jnp.float32) + bt_ref[...]
    proj = proj.reshape(b_tile, T, O_aug)                         # f32 (b, T, O_aug)

    # Softmax over tokens of the fused token_score column (f32).
    logit = proj[:, :, out_size:out_size + 1]                     # (b, T, 1)
    m = jnp.max(logit, axis=1, keepdims=True)
    e = jnp.exp(logit - m)
    score = e * pl.reciprocal(jnp.sum(e, axis=1, keepdims=True), approx=True)  # (b, T, 1)

    # Weighted pooling == torch.bmm(texts_0.permute(0,2,1), T_score) (f32).
    t_emb = jnp.sum(proj * score, axis=1)                         # (b, O_aug)

    # Classifier: Linear -> ReLU -> Linear -> ReLU.
    # wc1 rows >= out_size are zero, so the fused-score / padding lanes of t_emb are killed.
    c1 = jnp.maximum(
        jnp.dot(t_emb.astype(jnp.bfloat16), wc1_ref[...],
                preferred_element_type=jnp.float32) + bc1_ref[...], 0.0)
    logits = jnp.maximum(
        jnp.dot(c1.astype(jnp.bfloat16), wc2_ref[...],
                preferred_element_type=jnp.float32) + bc2_ref[...], 0.0)
    out_ref[...] = logits.astype(out_ref.dtype)                   # (b, 128) lane-dense


# ---------------------------------------------------------------------------
# Wrapper
# ---------------------------------------------------------------------------
def bert_vit_forward(imgs, encoded_texts, word_len, word_spans, kparams, *, b_tile=None):
    # imgs / word_len / word_spans accepted for API parity with the PyTorch forward.
    # For type='vit' the image branch does not influence the output, so it is skipped.
    del imgs, word_len, word_spans

    out_size = kparams['out_size']
    ncls = kparams['ncls']
    B, T, Dt = encoded_texts.shape
    Dt_pad, O_aug = kparams['wt'].shape
    O_h = kparams['wc1'].shape[1]
    C_pad = kparams['wc2'].shape[1]

    if b_tile is None:
        b_tile = min(128, _round_up(B, 8))       # multiple of 8 -> valid sublane tiling
    B_pad = _round_up(B, b_tile)

    texts = encoded_texts.astype(jnp.bfloat16)
    pad_b, pad_d = B_pad - B, Dt_pad - Dt
    if pad_b or pad_d:
        texts = jnp.pad(texts, ((0, pad_b), (0, 0), (0, pad_d)))

    kernel = partial(_bert_vit_kernel, out_size=out_size)
    out = pl.pallas_call(
        kernel,
        out_shape=jax.ShapeDtypeStruct((B_pad, C_pad), jnp.float32),
        grid_spec=pltpu.PrefetchScalarGridSpec(
            num_scalar_prefetch=0,
            grid=(B_pad // b_tile,),
            in_specs=[
                pl.BlockSpec((b_tile, T, Dt_pad), lambda i: (i, 0, 0)),   # texts (per-batch tile)
                pl.BlockSpec((Dt_pad, O_aug), lambda i: (0, 0)),          # wt (+fused score col)
                pl.BlockSpec((1, O_aug), lambda i: (0, 0)),               # bt
                pl.BlockSpec((O_aug, O_h), lambda i: (0, 0)),             # wc1
                pl.BlockSpec((1, O_h), lambda i: (0, 0)),                 # bc1
                pl.BlockSpec((O_h, C_pad), lambda i: (0, 0)),             # wc2
                pl.BlockSpec((1, C_pad), lambda i: (0, 0)),               # bc2
            ],
            out_specs=pl.BlockSpec((b_tile, C_pad), lambda i: (i, 0)),
        ),
        compiler_params=pltpu.CompilerParams(
            dimension_semantics=("parallel",)),
    )(texts, kparams['wt'], kparams['bt'], kparams['wc1'], kparams['bc1'],
      kparams['wc2'], kparams['bc2'])
    return out[:B, :ncls]


# ---------------------------------------------------------------------------
# Parameters
# ---------------------------------------------------------------------------
def init_params(key, dt, out, ncls=2):
    """Canonical f32 params for the text path + classifier (torch nn.Linear init)."""
    ks = jax.random.split(key, 4)

    def lin(k, fan_in, fan_out):
        kw, kb = jax.random.split(k)
        bound = 1.0 / jnp.sqrt(jnp.float32(fan_in))
        w = jax.random.uniform(kw, (fan_in, fan_out), jnp.float32, -bound, bound)
        b = jax.random.uniform(kb, (fan_out,), jnp.float32, -bound, bound)
        return w, b

    wt, bt = lin(ks[0], dt, out)        # TextEncoder projection (Dt -> out)
    wts, bts = lin(ks[1], out, 1)       # token_score
    wc1, bc1 = lin(ks[2], out, out)     # classifier[0]
    wc2, bc2 = lin(ks[3], out, ncls)    # classifier[2]
    # NOTE: ImageEncoder / patch_score params exist in the reference but are dead for
    # type='vit' (output depends only on T_emb), so they are omitted per perf review.
    return dict(wt=wt, bt=bt, wts=wts, bts=bts, wc1=wc1, bc1=bc1, wc2=wc2, bc2=bc2)


def prepare_kernel_params(params, *, dt, out_size, ncls=2):
    """Pad to 128-multiples, fuse token_score into the projection, cast weights to bf16."""
    Dt_pad = _round_up(dt, 128)
    O_aug = _round_up(out_size + 1, 128)   # projection width; column `out_size` = fused score
    O_h = _round_up(out_size, 128)         # classifier hidden width
    C_pad = _round_up(ncls, 128)           # lane-dense logits

    wt, bt = params['wt'], params['bt']
    wts, bts = params['wts'], params['bts']
    wc1, bc1 = params['wc1'], params['bc1']
    wc2, bc2 = params['wc2'], params['bc2']

    # (x@wt + bt)@wts + bts == x@(wt@wts) + (bt@wts + bts)  -> extra matmul column.
    fused_w = wt @ wts                     # (dt, 1)
    fused_b = bt @ wts + bts               # (1,)

    wt_aug = jnp.zeros((Dt_pad, O_aug), jnp.float32)
    wt_aug = wt_aug.at[:dt, :out_size].set(wt)
    wt_aug = wt_aug.at[:dt, out_size].set(fused_w[:, 0])
    bt_aug = jnp.zeros((1, O_aug), jnp.float32)
    bt_aug = bt_aug.at[0, :out_size].set(bt)
    bt_aug = bt_aug.at[0, out_size].set(fused_b[0])

    wc1_p = jnp.zeros((O_aug, O_h), jnp.float32).at[:out_size, :out_size].set(wc1)
    bc1_p = jnp.zeros((1, O_h), jnp.float32).at[0, :out_size].set(bc1)
    wc2_p = jnp.zeros((O_h, C_pad), jnp.float32).at[:out_size, :ncls].set(wc2)
    bc2_p = jnp.zeros((1, C_pad), jnp.float32).at[0, :ncls].set(bc2)

    return dict(
        wt=wt_aug.astype(jnp.bfloat16), bt=bt_aug,      # biases stay f32 (post-accumulate add)
        wc1=wc1_p.astype(jnp.bfloat16), bc1=bc1_p,
        wc2=wc2_p.astype(jnp.bfloat16), bc2=bc2_p,
        out_size=out_size, ncls=ncls,
    )


# ---------------------------------------------------------------------------
if __name__ == "__main__":
    key = jax.random.PRNGKey(0)
    kp, ki, kt = jax.random.split(key, 3)

    # Small shapes consistent with the forward (reference: Di=512, Dt=768, out=300).
    B, P, T = 2, 16, 8        # batch, image patches, text tokens
    Di, Dt = 64, 64           # image / text feature dims
    OUT = 32                  # out_size

    params = init_params(kp, dt=Dt, out=OUT, ncls=2)
    kparams = prepare_kernel_params(params, dt=Dt, out_size=OUT, ncls=2)

    imgs = jax.random.normal(ki, (B, P, Di), jnp.float32)
    encoded_texts = jax.random.normal(kt, (B, T, Dt), jnp.float32)
    word_len = jnp.full((B,), T, dtype=jnp.int32)
    word_spans = jnp.stack([jnp.arange(T), jnp.arange(T) + 1], axis=-1)[None]
    word_spans = jnp.repeat(word_spans, B, axis=0).astype(jnp.int32)

    out = bert_vit_forward(imgs, encoded_texts, word_len, word_spans, kparams)
    out = jax.block_until_ready(out)
    assert out.shape == (B, 2) and out.dtype == jnp.float32
    assert bool(jnp.all(jnp.isfinite(out)))
    print("KERNEL_OK")
</pallas_src>

<mosaic_0001>
module attributes {stable_mosaic.version = 11 : i64} {
  func.func @_bert_vit_kernel(%arg0: i32, %arg1: memref<8x8x128xbf16, #tpu.memory_space<vmem>>, %arg2: memref<128x128xbf16, #tpu.memory_space<vmem>>, %arg3: memref<1x128xf32, #tpu.memory_space<vmem>>, %arg4: memref<128x128xbf16, #tpu.memory_space<vmem>>, %arg5: memref<1x128xf32, #tpu.memory_space<vmem>>, %arg6: memref<128x128xbf16, #tpu.memory_space<vmem>>, %arg7: memref<1x128xf32, #tpu.memory_space<vmem>>, %arg8: memref<8x128xf32, #tpu.memory_space<vmem>>) attributes {dimension_semantics = [#tpu.dimension_semantics<parallel>], iteration_bounds = array<i64: 1>, scalar_prefetch = 0 : i64, scratch_operands = 0 : i64, tpu.core_type = #tpu.core_type<tc>, window_params = [{transform_indices = @transform_0, window_bounds = array<i64: 8, 8, 128>}, {pipeline_mode = #tpu.pipeline_mode<synchronous>, transform_indices = @transform_1, window_bounds = array<i64: 128, 128>}, {pipeline_mode = #tpu.pipeline_mode<synchronous>, transform_indices = @transform_2, window_bounds = array<i64: 1, 128>}, {pipeline_mode = #tpu.pipeline_mode<synchronous>, transform_indices = @transform_3, window_bounds = array<i64: 128, 128>}, {pipeline_mode = #tpu.pipeline_mode<synchronous>, transform_indices = @transform_4, window_bounds = array<i64: 1, 128>}, {pipeline_mode = #tpu.pipeline_mode<synchronous>, transform_indices = @transform_5, window_bounds = array<i64: 128, 128>}, {pipeline_mode = #tpu.pipeline_mode<synchronous>, transform_indices = @transform_6, window_bounds = array<i64: 1, 128>}, {transform_indices = @transform_7, window_bounds = array<i64: 8, 128>}]} {
    %c0 = arith.constant 0 : index
    %c0_0 = arith.constant 0 : index
    %c0_1 = arith.constant 0 : index
    %0 = vector.load %arg1[%c0, %c0_0, %c0_1] : memref<8x8x128xbf16, #tpu.memory_space<vmem>>, vector<8x8x128xbf16>
    %1 = vector.shape_cast %0 : vector<8x8x128xbf16> to vector<64x128xbf16>
    %c0_2 = arith.constant 0 : index
    %c0_3 = arith.constant 0 : index
    %2 = vector.load %arg2[%c0_2, %c0_3] : memref<128x128xbf16, #tpu.memory_space<vmem>>, vector<128x128xbf16>
    %cst = arith.constant dense<0.000000e+00> : vector<64x128xf32>
    %3 = tpu.matmul %1, %2, %cst {dimension_numbers = #tpu.dot_dimension_numbers<[1], [0], [0], [1], [0, 0, 1, 1], [], []>} : vector<64x128xbf16>, vector<128x128xbf16>, vector<64x128xf32> -> vector<64x128xf32>
    %c0_4 = arith.constant 0 : index
    %c0_5 = arith.constant 0 : index
    %4 = vector.load %arg3[%c0_4, %c0_5] : memref<1x128xf32, #tpu.memory_space<vmem>>, vector<1x128xf32>
    %5 = vector.broadcast %4 : vector<1x128xf32> to vector<64x128xf32>
    %6 = arith.addf %3, %5 : vector<64x128xf32>
    %7 = vector.shape_cast %6 : vector<64x128xf32> to vector<8x8x128xf32>
    %8 = vector.extract_strided_slice %7 {offsets = [0, 0, 32], sizes = [8, 8, 1], strides = [1, 1, 1]} : vector<8x8x128xf32> to vector<8x8x1xf32>
    %cst_6 = arith.constant dense<0xFF800000> : vector<8x1xf32>
    %9 = vector.multi_reduction <maximumf>, %8, %cst_6 [1] : vector<8x8x1xf32> to vector<8x1xf32>
    %10 = vector.shape_cast %9 : vector<8x1xf32> to vector<8x1x1xf32>
    %11 = vector.broadcast %10 : vector<8x1x1xf32> to vector<8x8x1xf32>
    %12 = arith.subf %8, %11 : vector<8x8x1xf32>
    %13 = math.exp %12 : vector<8x8x1xf32>
    %cst_7 = arith.constant dense<0.000000e+00> : vector<8x1xf32>
    %14 = vector.multi_reduction <add>, %13, %cst_7 [1] : vector<8x8x1xf32> to vector<8x1xf32>
    %15 = vector.shape_cast %14 : vector<8x1xf32> to vector<8x1x1xf32>
    %16 = tpu.reciprocal %15 {approx = true} : vector<8x1x1xf32> -> vector<8x1x1xf32>
    %17 = vector.broadcast %16 : vector<8x1x1xf32> to vector<8x8x1xf32>
    %18 = arith.mulf %13, %17 : vector<8x8x1xf32>
    %19 = vector.broadcast %18 : vector<8x8x1xf32> to vector<8x8x128xf32>
    %20 = arith.mulf %7, %19 : vector<8x8x128xf32>
    %cst_8 = arith.constant dense<0.000000e+00> : vector<8x128xf32>
    %21 = vector.multi_reduction <add>, %20, %cst_8 [1] : vector<8x8x128xf32> to vector<8x128xf32>
    %22 = arith.truncf %21 : vector<8x128xf32> to vector<8x128xbf16>
    %c0_9 = arith.constant 0 : index
    %c0_10 = arith.constant 0 : index
    %23 = vector.load %arg4[%c0_9, %c0_10] : memref<128x128xbf16, #tpu.memory_space<vmem>>, vector<128x128xbf16>
    %cst_11 = arith.constant dense<0.000000e+00> : vector<8x128xf32>
    %24 = tpu.matmul %22, %23, %cst_11 {dimension_numbers = #tpu.dot_dimension_numbers<[1], [0], [0], [1], [0, 0, 1, 1], [], []>} : vector<8x128xbf16>, vector<128x128xbf16>, vector<8x128xf32> -> vector<8x128xf32>
    %c0_12 = arith.constant 0 : index
    %c0_13 = arith.constant 0 : index
    %25 = vector.load %arg5[%c0_12, %c0_13] : memref<1x128xf32, #tpu.memory_space<vmem>>, vector<1x128xf32>
    %26 = vector.broadcast %25 : vector<1x128xf32> to vector<8x128xf32>
    %27 = arith.addf %24, %26 : vector<8x128xf32>
    %cst_14 = arith.constant 0.000000e+00 : f32
    %28 = vector.broadcast %cst_14 : f32 to vector<8x128xf32>
    %29 = arith.maximumf %27, %28 : vector<8x128xf32>
    %30 = arith.truncf %29 : vector<8x128xf32> to vector<8x128xbf16>
    %c0_15 = arith.constant 0 : index
    %c0_16 = arith.constant 0 : index
    %31 = vector.load %arg6[%c0_15, %c0_16] : memref<128x128xbf16, #tpu.memory_space<vmem>>, vector<128x128xbf16>
    %cst_17 = arith.constant dense<0.000000e+00> : vector<8x128xf32>
    %32 = tpu.matmul %30, %31, %cst_17 {dimension_numbers = #tpu.dot_dimension_numbers<[1], [0], [0], [1], [0, 0, 1, 1], [], []>} : vector<8x128xbf16>, vector<128x128xbf16>, vector<8x128xf32> -> vector<8x128xf32>
    %c0_18 = arith.constant 0 : index
    %c0_19 = arith.constant 0 : index
    %33 = vector.load %arg7[%c0_18, %c0_19] : memref<1x128xf32, #tpu.memory_space<vmem>>, vector<1x128xf32>
    %34 = vector.broadcast %33 : vector<1x128xf32> to vector<8x128xf32>
    %35 = arith.addf %32, %34 : vector<8x128xf32>
    %cst_20 = arith.constant 0.000000e+00 : f32
    %36 = vector.broadcast %cst_20 : f32 to vector<8x128xf32>
    %37 = arith.maximumf %35, %36 : vector<8x128xf32>
    %c0_21 = arith.constant 0 : index
    %c0_22 = arith.constant 0 : index
    %38 = vector.load %arg8[%c0_21, %c0_22] : memref<8x128xf32, #tpu.memory_space<vmem>>, vector<8x128xf32>
    tpu.vector_store %arg8[%c0_21, %c0_22], %37 {strides = array<i32>} : memref<8x128xf32, #tpu.memory_space<vmem>>, vector<8x128xf32>,
    return
  }
  func.func @transform_0(%arg0: i32) -> (i32, i32, i32) {
    %c0_i32 = arith.constant 0 : i32
    %c0_i32_0 = arith.constant 0 : i32
    %c0_i32_1 = arith.constant 0 : i32
    return %arg0, %c0_i32, %c0_i32_0 : i32, i32, i32
  }
  func.func @transform_1(%arg0: i32) -> (i32, i32) {
    %c0_i32 = arith.constant 0 : i32
    %c0_i32_0 = arith.constant 0 : i32
    %c0_i32_1 = arith.constant 0 : i32
    return %c0_i32, %c0_i32_0 : i32, i32
  }
  func.func @transform_2(%arg0: i32) -> (i32, i32) {
    %c0_i32 = arith.constant 0 : i32
    %c0_i32_0 = arith.constant 0 : i32
    %c0_i32_1 = arith.constant 0 : i32
    return %c0_i32, %c0_i32_0 : i32, i32
  }
  func.func @transform_3(%arg0: i32) -> (i32, i32) {
    %c0_i32 = arith.constant 0 : i32
    %c0_i32_0 = arith.constant 0 : i32
    %c0_i32_1 = arith.constant 0 : i32
    return %c0_i32, %c0_i32_0 : i32, i32
  }
  func.func @transform_4(%arg0: i32) -> (i32, i32) {
    %c0_i32 = arith.constant 0 : i32
    %c0_i32_0 = arith.constant 0 : i32
    %c0_i32_1 = arith.constant 0 : i32
    return %c0_i32, %c0_i32_0 : i32, i32
  }
  func.func @transform_5(%arg0: i32) -> (i32, i32) {
    %c0_i32 = arith.constant 0 : i32
    %c0_i32_0 = arith.constant 0 : i32
    %c0_i32_1 = arith.constant 0 : i32
    return %c0_i32, %c0_i32_0 : i32, i32
  }
  func.func @transform_6(%arg0: i32) -> (i32, i32) {
    %c0_i32 = arith.constant 0 : i32
    %c0_i32_0 = arith.constant 0 : i32
    %c0_i32_1 = arith.constant 0 : i32
    return %c0_i32, %c0_i32_0 : i32, i32
  }
  func.func @transform_7(%arg0: i32) -> (i32, i32) {
    %c0_i32 = arith.constant 0 : i32
    %c0_i32_0 = arith.constant 0 : i32
    return %arg0, %c0_i32 : i32, i32
  }
}

</mosaic_0001>

<llo_original>
// kernel: tpu_custom_call.1
$region0: #{tpu_custom_call.1}
  #allocation0 [shape = 'u32[]', space=smem, size = 0x4, offset = 0x4, fixed_abs, tag = 'smem constant byte address 0x4 - core index']
  #allocation1 [shape = 'u32[144,128]{1,0:T(1,128)}', space=vmem, size = 0x12000, scoped, tag = 'internal scratch']
  %s0 = inlined_call_operand.hbm [shape: bf16[8,8,128], index: 0, kind: input, shape index: {}]
  %s1 = inlined_call_operand.hbm [shape: bf16[128,128], index: 1, kind: input, shape index: {}]
  %s2 = inlined_call_operand.vmem [shape: f32[1,128], index: 2, kind: input, shape index: {}]
  %s3 = inlined_call_operand.hbm [shape: bf16[128,128], index: 3, kind: input, shape index: {}]
  %s4 = inlined_call_operand.vmem [shape: f32[1,128], index: 4, kind: input, shape index: {}]
  %s5 = inlined_call_operand.hbm [shape: bf16[128,128], index: 5, kind: input, shape index: {}]
  %s6 = inlined_call_operand.vmem [shape: f32[1,128], index: 6, kind: input, shape index: {}]
  %s7 = inlined_call_operand.hbm [shape: f32[8,128], index: 7, kind: output, shape index: {}]
  %s8 = sld [smem:[#allocation0]]
  $region54: #{tpu_custom_call.1} parent=0
    _
  %s10 = ssub.s32 1, %s8
  %s11 = scalar_select 0, %s10, %s8
  $region1: #{tpu_custom_call.1} parent=0
    #allocation2 [shape = 'u8[16384]{0}', space=vmem, size = 0x4000, scoped, tag = 'input window, operand 0, single buffered']
    #allocation3 [shape = 's32[1]{0}', space=sflag, size = 0x4, scoped, tag = 'scoped memory for tpu_custom_call.1']
    #allocation4 [shape = 's32[1]{0}', space=sflag, size = 0x4, scoped, tag = 'scoped memory for tpu_custom_call.1']
    #allocation5 [shape = 'u8[32768]{0}', space=vmem, size = 0x8000, scoped, tag = 'input window, operand 1, single buffered']
    #allocation6 [shape = 's32[1]{0}', space=sflag, size = 0x4, scoped, tag = 'scoped memory for tpu_custom_call.1']
    #allocation7 [shape = 'u8[32768]{0}', space=vmem, size = 0x8000, scoped, tag = 'input window, operand 3, single buffered']
    #allocation8 [shape = 'u8[32768]{0}', space=vmem, size = 0x8000, scoped, tag = 'input window, operand 5, single buffered']
    #allocation9 [shape = 's32[1]{0}', space=sflag, size = 0x4, scoped, tag = 'scoped memory for tpu_custom_call.1']
    #allocation10 [shape = 'u8[4096]{0}', space=vmem, size = 0x1000, scoped, tag = 'output window, operand 0, single buffered']
    %12 = vsyncpa [#allocation3], 0
    %13 = vsyncpa [#allocation6], 0
    %14 = vsyncpa [#allocation9], 0
    %15 = vsyncpa [#allocation4], 0
    // Predicated region
    $region2: #{tpu_custom_call.1} parent=1 // pred_check
      _
    $region3: #{tpu_custom_call.1} parent=1 // pred_check_branch
      %17 = sbr.rel (0) target = $region5
    $region4: #{tpu_custom_call.1} parent=1 // pred_region
      %s19 = ssub.s32 512, 512
      %20 = vsyncadd [#allocation3], %s19
      %s21 = sshll.u32 [#allocation2], 4
      %s22 = int_to_ptr.vmem [resolvable:$true] %s21
      %27 = dma.hbm_to_vmem [thread:$0]  %s0, 512, %s22, [#allocation3], 64, 64, 4
    $region5: #{tpu_custom_call.1} parent=1 // pred_fallthru
      _
    // Predicated region
    $region6: #{tpu_custom_call.1} parent=1 // pred_check
      _
    $region7: #{tpu_custom_call.1} parent=1 // pred_check_branch
      %29 = sbr.rel (0) target = $region9
    $region8: #{tpu_custom_call.1} parent=1 // pred_region
      %s31 = ssub.s32 1024, 1024
      %32 = vsyncadd [#allocation6], %s31
      %s33 = sshll.u32 [#allocation5], 4
      %s34 = int_to_ptr.vmem [resolvable:$true] %s33
      %39 = dma.hbm_to_vmem [thread:$0]  %s1, 1024, %s34, [#allocation6], 64, 64, 4
    $region9: #{tpu_custom_call.1} parent=1 // pred_fallthru
      _
    // Predicated region
    $region10: #{tpu_custom_call.1} parent=1 // pred_check
      _
    $region11: #{tpu_custom_call.1} parent=1 // pred_check_branch
      %41 = sbr.rel (0) target = $region13
    $region12: #{tpu_custom_call.1} parent=1 // pred_region
      _
    $region13: #{tpu_custom_call.1} parent=1 // pred_fallthru
      _
    // Predicated region
    $region14: #{tpu_custom_call.1} parent=1 // pred_check
      _
    $region15: #{tpu_custom_call.1} parent=1 // pred_check_branch
      %43 = sbr.rel (0) target = $region17
    $region16: #{tpu_custom_call.1} parent=1 // pred_region
      %s45 = ssub.s32 1024, 1024
      %46 = vsyncadd [#allocation6], %s45
      %s47 = sshll.u32 [#allocation7], 4
      %s48 = int_to_ptr.vmem [resolvable:$true] %s47
      %53 = dma.hbm_to_vmem [thread:$0]  %s3, 1024, %s48, [#allocation6], 64, 64, 4
    $region17: #{tpu_custom_call.1} parent=1 // pred_fallthru
      _
    // Predicated region
    $region18: #{tpu_custom_call.1} parent=1 // pred_check
      _
    $region19: #{tpu_custom_call.1} parent=1 // pred_check_branch
      %55 = sbr.rel (0) target = $region21
    $region20: #{tpu_custom_call.1} parent=1 // pred_region
      _
    $region21: #{tpu_custom_call.1} parent=1 // pred_fallthru
      _
    // Predicated region
    $region22: #{tpu_custom_call.1} parent=1 // pred_check
      _
    $region23: #{tpu_custom_call.1} parent=1 // pred_check_branch
      %57 = sbr.rel (0) target = $region25
    $region24: #{tpu_custom_call.1} parent=1 // pred_region
      %s59 = ssub.s32 1024, 1024
      %60 = vsyncadd [#allocation9], %s59
      %s61 = sshll.u32 [#allocation8], 4
      %s62 = int_to_ptr.vmem [resolvable:$true] %s61
      %67 = dma.hbm_to_vmem [thread:$0]  %s5, 1024, %s62, [#allocation9], 64, 64, 4
    $region25: #{tpu_custom_call.1} parent=1 // pred_fallthru
      _
    // Predicated region
    $region26: #{tpu_custom_call.1} parent=1 // pred_check
      _
    $region27: #{tpu_custom_call.1} parent=1 // pred_check_branch
      %69 = sbr.rel (0) target = $region29
    $region28: #{tpu_custom_call.1} parent=1 // pred_region
      _
    $region29: #{tpu_custom_call.1} parent=1 // pred_fallthru
      _
    // Predicated region
    $region30: #{tpu_custom_call.1} parent=1 // pred_check
      _
    $region31: #{tpu_custom_call.1} parent=1 // pred_check_branch
      %71 = sbr.rel (0) target = $region33
    $region32: #{tpu_custom_call.1} parent=1 // pred_region
      %72 = dma.done [#allocation3], 512
    $region33: #{tpu_custom_call.1} parent=1 // pred_fallthru
      _
    // Predicated region
    $region34: #{tpu_custom_call.1} parent=1 // pred_check
      _
    $region35: #{tpu_custom_call.1} parent=1 // pred_check_branch
      %74 = sbr.rel (0) target = $region37
    $region36: #{tpu_custom_call.1} parent=1 // pred_region
      %75 = dma.done [#allocation6], 1024
    $region37: #{tpu_custom_call.1} parent=1 // pred_fallthru
      _
    // Predicated region
    $region38: #{tpu_custom_call.1} parent=1 // pred_check
      _
    $region39: #{tpu_custom_call.1} parent=1 // pred_check_branch
      %77 = sbr.rel (0) target = $region41
    $region40: #{tpu_custom_call.1} parent=1 // pred_region
      %78 = dma.done [#allocation6], 1024
    $region41: #{tpu_custom_call.1} parent=1 // pred_fallthru
      _
    // Predicated region
    $region42: #{tpu_custom_call.1} parent=1 // pred_check
      _
    $region43: #{tpu_custom_call.1} parent=1 // pred_check_branch
      %80 = sbr.rel (0) target = $region45
    $region44: #{tpu_custom_call.1} parent=1 // pred_region
      %81 = dma.done [#allocation9], 1024
    $region45: #{tpu_custom_call.1} parent=1 // pred_fallthru
      _
    %v83 = vld [vmem:[#allocation2] sm:$0xf]
    %v84 = vld [vmem:[#allocation2 + $0x4] sm:$0xf]
    %v85 = vld [vmem:[#allocation2 + $0x8] sm:$0xf]
    %v86 = vld [vmem:[#allocation2 + $0xc] sm:$0xf]
    %v87 = vld [vmem:[#allocation2 + $0x10] sm:$0xf]
    %v88 = vld [vmem:[#allocation2 + $0x14] sm:$0xf]
    %v89 = vld [vmem:[#allocation2 + $0x18] sm:$0xf]
    %v90 = vld [vmem:[#allocation2 + $0x1c] sm:$0xf]
    %v91 = vld [vmem:[#allocation5] sm:$0xf]
    %v92 = vld [vmem:[#allocation5 + $0x4] sm:$0xf]
    %v93 = vld [vmem:[#allocation5 + $0x8] sm:$0xf]
    %v94 = vld [vmem:[#allocation5 + $0xc] sm:$0xf]
    %v95 = vld [vmem:[#allocation5 + $0x10] sm:$0xf]
    %v96 = vld [vmem:[#allocation5 + $0x14] sm:$0xf]
    %v97 = vld [vmem:[#allocation5 + $0x18] sm:$0xf]
    %v98 = vld [vmem:[#allocation5 + $0x1c] sm:$0xf]
    %v99 = vld [vmem:[#allocation5 + $0x20] sm:$0xf]
    %v100 = vld [vmem:[#allocation5 + $0x24] sm:$0xf]
    %v101 = vld [vmem:[#allocation5 + $0x28] sm:$0xf]
    %v102 = vld [vmem:[#allocation5 + $0x2c] sm:$0xf]
    %v103 = vld [vmem:[#allocation5 + $0x30] sm:$0xf]
    %v104 = vld [vmem:[#allocation5 + $0x34] sm:$0xf]
    %v105 = vld [vmem:[#allocation5 + $0x38] sm:$0xf]
    %v106 = vld [vmem:[#allocation5 + $0x3c] sm:$0xf]
    %v107 = vld [vmem:[%s2] sm:$0x1]
    %v109 = vlaneseq
    %v110 = vshrl.u32 %v109, 7
    %v111 = vsub.s32 0, %v110
    %v112 = vrot.slane %v107, %v111
    %v122 = vunpack.c.l.b16 %v83
    %v123 = vunpack.c.l.b16 %v84
    %v124 = vunpack.c.l.b16 %v85
    %v125 = vunpack.c.l.b16 %v86
    %v126 = vunpack.c.l.b16 %v87
    %v127 = vunpack.c.l.b16 %v88
    %v128 = vunpack.c.l.b16 %v89
    %v129 = vunpack.c.l.b16 %v90
    %v130 = vpack.c.b16 %v123, %v122
    %v131 = vpack.c.b16 %v125, %v124
    %v132 = vpack.c.b16 %v127, %v126
    %v133 = vpack.c.b16 %v129, %v128
    %v154 = vunpack.c.l.b16 %v91
    %v155 = vunpack.c.l.b16 %v92
    %v156 = vunpack.c.l.b16 %v93
    %v157 = vunpack.c.l.b16 %v94
    %v158 = vunpack.c.l.b16 %v95
    %v159 = vunpack.c.l.b16 %v96
    %v160 = vunpack.c.l.b16 %v97
    %v161 = vunpack.c.l.b16 %v98
    %v162 = vunpack.c.l.b16 %v99
    %v163 = vunpack.c.l.b16 %v100
    %v164 = vunpack.c.l.b16 %v101
    %v165 = vunpack.c.l.b16 %v102
    %v166 = vunpack.c.l.b16 %v103
    %v167 = vunpack.c.l.b16 %v104
    %v168 = vunpack.c.l.b16 %v105
    %v169 = vunpack.c.l.b16 %v106
    %v170 = vpack.c.b16 %v155, %v154
    %v171 = vpack.c.b16 %v157, %v156
    %v172 = vpack.c.b16 %v159, %v158
    %v173 = vpack.c.b16 %v161, %v160
    %v174 = vpack.c.b16 %v163, %v162
    %v175 = vpack.c.b16 %v165, %v164
    %v176 = vpack.c.b16 %v167, %v166
    %v177 = vpack.c.b16 %v169, %v168
    %186 = vmatprep.subr.bf16.mxu0 0
    %187 = vmatpush1.bf16.msra.mxu0 %v170
    %188 = vmatprep.subr.bf16.mxu0 0
    %189 = vmatpush1.bf16.msra.mxu0 %v171
    %190 = vmatprep.subr.bf16.mxu0 0
    %191 = vmatpush1.bf16.msra.mxu0 %v172
    %192 = vmatprep.subr.bf16.mxu0 0
    %193 = vmatpush1.bf16.msra.mxu0 %v173
    %194 = vmatprep.subr.bf16.mxu0 0
    %195 = vmatpush1.bf16.msra.mxu0 %v174
    %196 = vmatprep.subr.bf16.mxu0 0
    %197 = vmatpush1.bf16.msra.mxu0 %v175
    %198 = vmatprep.subr.bf16.mxu0 0
    %199 = vmatpush1.bf16.msra.mxu0 %v176
    %200 = vmatprep.subr.bf16.mxu0 0
    %201 = vmatpush1.bf16.msra.mxu0 %v177
    %202 = vmatprep.subr.bf16.mxu0 0
    %203 = vmatpush1.bf16.msra.mxu0 0
    %204 = vmatprep.subr.bf16.mxu0 0
    %205 = vmatpush1.bf16.msra.mxu0 0
    %206 = vmatprep.subr.bf16.mxu0 0
    %207 = vmatpush1.bf16.msra.mxu0 0
    %208 = vmatprep.subr.bf16.mxu0 0
    %209 = vmatpush1.bf16.msra.mxu0 0
    %210 = vmatprep.subr.bf16.mxu0 0
    %211 = vmatpush1.bf16.msra.mxu0 0
    %212 = vmatprep.subr.bf16.mxu0 0
    %213 = vmatpush1.bf16.msra.mxu0 0
    %214 = vmatprep.subr.bf16.mxu0 0
    %215 = vmatpush1.bf16.msra.mxu0 0
    %216 = vmatprep.subr.bf16.mxu0 0
    %217 = vmatpush1.bf16.msra.mxu0 0
    %218 = vmatprep.mubr.bf16.mxu0 0
    %219 = vmatmul.mubr.bf16.gmra.mrb[0].mxu0 %v130
    %v220 = vpop.f32.mrb[0].mxu0
    %v221 = vadd.f32 %v112, %v220
    %v222 = vpop.f32.mrb[0].mxu0
    %v223 = vpop.f32.mrb[0].mxu0
    %v224 = vadd.f32 %v112, %v223
    %v225 = vpop.f32.mrb[0].mxu0
    %226 = vmatprep.mubr.bf16.mxu0 0
    %227 = vmatmul.mubr.bf16.gmra.mrb[0].mxu0 %v131
    %v228 = vpop.f32.mrb[0].mxu0
    %v229 = vadd.f32 %v112, %v228
    %v230 = vpop.f32.mrb[0].mxu0
    %v231 = vpop.f32.mrb[0].mxu0
    %v232 = vadd.f32 %v112, %v231
    %v233 = vpop.f32.mrb[0].mxu0
    %234 = vmatprep.mubr.bf16.mxu0 0
    %235 = vmatmul.mubr.bf16.gmra.mrb[0].mxu0 %v132
    %v236 = vpop.f32.mrb[0].mxu0
    %v237 = vadd.f32 %v112, %v236
    %v238 = vpop.f32.mrb[0].mxu0
    %v239 = vpop.f32.mrb[0].mxu0
    %v240 = vadd.f32 %v112, %v239
    %v241 = vpop.f32.mrb[0].mxu0
    %242 = vmatprep.mubr.bf16.mxu0 0
    %243 = vmatmul.mubr.bf16.gmra.mrb[0].mxu0 %v133
    %v244 = vpop.f32.mrb[0].mxu0
    %v245 = vadd.f32 %v112, %v244
    %v246 = vpop.f32.mrb[0].mxu0
    %v247 = vpop.f32.mrb[0].mxu0
    %v248 = vadd.f32 %v112, %v247
    %v249 = vpop.f32.mrb[0].mxu0
    %250 = vdwg.mxu0
    %vm251 = vcmask 269568
    %v252 = vsel %vm251, %v221, -inf
    %v253 = vrot.slane %v252, 4
    %v254 = vmax.f32 %v252, %v253
    %v255 = vrot.slane %v254, 2
    %v256 = vmax.f32 %v254, %v255
    %v257 = vrot.slane %v256, 1
    %v258 = vmax.f32 %v256, %v257
    %v259 = vsel %vm251, %v224, -inf
    %v260 = vrot.slane %v259, 4
    %v261 = vmax.f32 %v259, %v260
    %v262 = vrot.slane %v261, 2
    %v263 = vmax.f32 %v261, %v262
    %v264 = vrot.slane %v263, 1
    %v265 = vmax.f32 %v263, %v264
    %v266 = vsel %vm251, %v229, -inf
    %v267 = vrot.slane %v266, 4
    %v268 = vmax.f32 %v266, %v267
    %v269 = vrot.slane %v268, 2
    %v270 = vmax.f32 %v268, %v269
    %v271 = vrot.slane %v270, 1
    %v272 = vmax.f32 %v270, %v271
    %v273 = vsel %vm251, %v232, -inf
    %v274 = vrot.slane %v273, 4
    %v275 = vmax.f32 %v273, %v274
    %v276 = vrot.slane %v275, 2
    %v277 = vmax.f32 %v275, %v276
    %v278 = vrot.slane %v277, 1
    %v279 = vmax.f32 %v277, %v278
    %v280 = vsel %vm251, %v237, -inf
    %v281 = vrot.slane %v280, 4
    %v282 = vmax.f32 %v280, %v281
    %v283 = vrot.slane %v282, 2
    %v284 = vmax.f32 %v282, %v283
    %v285 = vrot.slane %v284, 1
    %v286 = vmax.f32 %v284, %v285
    %v287 = vsel %vm251, %v240, -inf
    %v288 = vrot.slane %v287, 4
    %v289 = vmax.f32 %v287, %v288
    %v290 = vrot.slane %v289, 2
    %v291 = vmax.f32 %v289, %v290
    %v292 = vrot.slane %v291, 1
    %v293 = vmax.f32 %v291, %v292
    %v294 = vsel %vm251, %v245, -inf
    %v295 = vrot.slane %v294, 4
    %v296 = vmax.f32 %v294, %v295
    %v297 = vrot.slane %v296, 2
    %v298 = vmax.f32 %v296, %v297
    %v299 = vrot.slane %v298, 1
    %v300 = vmax.f32 %v298, %v299
    %v301 = vsel %vm251, %v248, -inf
    %v302 = vrot.slane %v301, 4
    %v303 = vmax.f32 %v301, %v302
    %v304 = vrot.slane %v303, 2
    %v305 = vmax.f32 %v303, %v304
    %v306 = vrot.slane %v305, 1
    %v307 = vmax.f32 %v305, %v306
    %v308 = vsub.f32 %v221, %v258
    %v309 = vsub.f32 %v224, %v265
    %v310 = vsub.f32 %v229, %v272
    %v311 = vsub.f32 %v232, %v279
    %v312 = vsub.f32 %v237, %v286
    %v313 = vsub.f32 %v240, %v293
    %v314 = vsub.f32 %v245, %v300
    %v315 = vsub.f32 %v248, %v307
    %v316 = vmul.f32 %v308, 1.442695
    %v317 = vpow.pop %v316
    %v318 = vmul.f32 %v309, 1.442695
    %v319 = vpow.pop %v318
    %v320 = vmul.f32 %v310, 1.442695
    %v321 = vpow.pop %v320
    %v322 = vmul.f32 %v311, 1.442695
    %v323 = vpow.pop %v322
    %v324 = vmul.f32 %v312, 1.442695
    %v325 = vpow.pop %v324
    %v326 = vmul.f32 %v313, 1.442695
    %v327 = vpow.pop %v326
    %v328 = vmul.f32 %v314, 1.442695
    %v329 = vpow.pop %v328
    %v330 = vmul.f32 %v315, 1.442695
    %v331 = vpow.pop %v330
    %v332 = vsel %vm251, %v317, 0.0
    %v333 = vrot.slane %v332, 4
    %v334 = vadd.f32 %v332, %v333
    %v335 = vrot.slane %v334, 2
    %v336 = vadd.f32 %v334, %v335
    %v337 = vrot.slane %v336, 1
    %v338 = vadd.f32 %v336, %v337
    %v339 = vsel %vm251, %v319, 0.0
    %v340 = vrot.slane %v339, 4
    %v341 = vadd.f32 %v339, %v340
    %v342 = vrot.slane %v341, 2
    %v343 = vadd.f32 %v341, %v342
    %v344 = vrot.slane %v343, 1
    %v345 = vadd.f32 %v343, %v344
    %v346 = vsel %vm251, %v321, 0.0
    %v347 = vrot.slane %v346, 4
    %v348 = vadd.f32 %v346, %v347
    %v349 = vrot.slane %v348, 2
    %v350 = vadd.f32 %v348, %v349
    %v351 = vrot.slane %v350, 1
    %v352 = vadd.f32 %v350, %v351
    %v353 = vsel %vm251, %v323, 0.0
    %v354 = vrot.slane %v353, 4
    %v355 = vadd.f32 %v353, %v354
    %v356 = vrot.slane %v355, 2
    %v357 = vadd.f32 %v355, %v356
    %v358 = vrot.slane %v357, 1
    %v359 = vadd.f32 %v357, %v358
    %v360 = vsel %vm251, %v325, 0.0
    %v361 = vrot.slane %v360, 4
    %v362 = vadd.f32 %v360, %v361
    %v363 = vrot.slane %v362, 2
    %v364 = vadd.f32 %v362, %v363
    %v365 = vrot.slane %v364, 1
    %v366 = vadd.f32 %v364, %v365
    %v367 = vsel %vm251, %v327, 0.0
    %v368 = vrot.slane %v367, 4
    %v369 = vadd.f32 %v367, %v368
    %v370 = vrot.slane %v369, 2
    %v371 = vadd.f32 %v369, %v370
    %v372 = vrot.slane %v371, 1
    %v373 = vadd.f32 %v371, %v372
    %v374 = vsel %vm251, %v329, 0.0
    %v375 = vrot.slane %v374, 4
    %v376 = vadd.f32 %v374, %v375
    %v377 = vrot.slane %v376, 2
    %v378 = vadd.f32 %v376, %v377
    %v379 = vrot.slane %v378, 1
    %v380 = vadd.f32 %v378, %v379
    %v381 = vsel %vm251, %v331, 0.0
    %v382 = vrot.slane %v381, 4
    %v383 = vadd.f32 %v381, %v382
    %v384 = vrot.slane %v383, 2
    %v385 = vadd.f32 %v383, %v384
    %v386 = vrot.slane %v385, 1
    %v387 = vadd.f32 %v385, %v386
    %v388 = vrcp.pop %v338
    %v389 = vrcp.pop %v345
    %v390 = vrcp.pop %v352
    %v391 = vrcp.pop %v359
    %v392 = vrcp.pop %v366
    %v393 = vrcp.pop %v373
    %v394 = vrcp.pop %v380
    %v395 = vrcp.pop %v387
    %v396 = vmul.f32 %v317, %v388
    %v397 = vmul.f32 %v319, %v389
    %v398 = vmul.f32 %v321, %v390
    %v399 = vmul.f32 %v323, %v391
    %v400 = vmul.f32 %v325, %v392
    %v401 = vmul.f32 %v327, %v393
    %v402 = vmul.f32 %v329, %v394
    %v403 = vmul.f32 %v331, %v395
    %405 = vset.pattern.permute.xlu0 32
    %406 = vperm.xlu0 %405, %v396
    %v407 = vpop.permute.xlu0 %406
    %410 = vset.pattern.permute.xlu0 32
    %411 = vperm.xlu0 %410, %v397
    %v412 = vpop.permute.xlu0 %411
    %415 = vset.pattern.permute.xlu0 32
    %416 = vperm.xlu0 %415, %v398
    %v417 = vpop.permute.xlu0 %416
    %420 = vset.pattern.permute.xlu0 32
    %421 = vperm.xlu0 %420, %v399
    %v422 = vpop.permute.xlu0 %421
    %425 = vset.pattern.permute.xlu0 32
    %426 = vperm.xlu0 %425, %v400
    %v427 = vpop.permute.xlu0 %426
    %430 = vset.pattern.permute.xlu0 32
    %431 = vperm.xlu0 %430, %v401
    %v432 = vpop.permute.xlu0 %431
    %435 = vset.pattern.permute.xlu0 32
    %436 = vperm.xlu0 %435, %v402
    %v437 = vpop.permute.xlu0 %436
    %440 = vset.pattern.permute.xlu0 32
    %441 = vperm.xlu0 %440, %v403
    %v442 = vpop.permute.xlu0 %441
    %v444 = vmul.f32 %v221, %v407
    %v445 = vmul.f32 %v224, %v412
    %v446 = vmul.f32 %v229, %v417
    %v447 = vmul.f32 %v232, %v422
    %v448 = vmul.f32 %v237, %v427
    %v449 = vmul.f32 %v240, %v432
    %v450 = vmul.f32 %v245, %v437
    %v451 = vmul.f32 %v248, %v442
    %v452 = vrot.slane %v444, 4
    %v453 = vadd.f32 %v444, %v452
    %v454 = vrot.slane %v453, 2
    %v455 = vadd.f32 %v453, %v454
    %v456 = vrot.slane %v455, 1
    %v457 = vadd.f32 %v455, %v456
    %v458 = vrot.slane %v445, 4
    %v459 = vadd.f32 %v445, %v458
    %v460 = vrot.slane %v459, 2
    %v461 = vadd.f32 %v459, %v460
    %v462 = vrot.slane %v461, 1
    %v463 = vadd.f32 %v461, %v462
    %v464 = vrot.slane %v446, 4
    %v465 = vadd.f32 %v446, %v464
    %v466 = vrot.slane %v465, 2
    %v467 = vadd.f32 %v465, %v466
    %v468 = vrot.slane %v467, 1
    %v469 = vadd.f32 %v467, %v468
    %v470 = vrot.slane %v447, 4
    %v471 = vadd.f32 %v447, %v470
    %v472 = vrot.slane %v471, 2
    %v473 = vadd.f32 %v471, %v472
    %v474 = vrot.slane %v473, 1
    %v475 = vadd.f32 %v473, %v474
    %v476 = vrot.slane %v448, 4
    %v477 = vadd.f32 %v448, %v476
    %v478 = vrot.slane %v477, 2
    %v479 = vadd.f32 %v477, %v478
    %v480 = vrot.slane %v479, 1
    %v481 = vadd.f32 %v479, %v480
    %v482 = vrot.slane %v449, 4
    %v483 = vadd.f32 %v449, %v482
    %v484 = vrot.slane %v483, 2
    %v485 = vadd.f32 %v483, %v484
    %v486 = vrot.slane %v485, 1
    %v487 = vadd.f32 %v485, %v486
    %v488 = vrot.slane %v450, 4
    %v489 = vadd.f32 %v450, %v488
    %v490 = vrot.slane %v489, 2
    %v491 = vadd.f32 %v489, %v490
    %v492 = vrot.slane %v491, 1
    %v493 = vadd.f32 %v491, %v492
    %v494 = vrot.slane %v451, 4
    %v495 = vadd.f32 %v451, %v494
    %v496 = vrot.slane %v495, 2
    %v497 = vadd.f32 %v495, %v496
    %v498 = vrot.slane %v497, 1
    %v499 = vadd.f32 %v497, %v498
    %v500 = vpack.c.bf16 %v457, %v457
    %v501 = vpack.c.bf16 %v463, %v463
    %v502 = vpack.c.bf16 %v469, %v469
    %v503 = vpack.c.bf16 %v475, %v475
    %v504 = vpack.c.bf16 %v481, %v481
    %v505 = vpack.c.bf16 %v487, %v487
    %v506 = vpack.c.bf16 %v493, %v493
    %v507 = vpack.c.bf16 %v499, %v499
    %v508 = vld [vmem:[#allocation7] sm:$0xf]
    %v509 = vld [vmem:[#allocation7 + $0x4] sm:$0xf]
    %v510 = vld [vmem:[#allocation7 + $0x8] sm:$0xf]
    %v511 = vld [vmem:[#allocation7 + $0xc] sm:$0xf]
    %v512 = vld [vmem:[#allocation7 + $0x10] sm:$0xf]
    %v513 = vld [vmem:[#allocation7 + $0x14] sm:$0xf]
    %v514 = vld [vmem:[#allocation7 + $0x18] sm:$0xf]
    %v515 = vld [vmem:[#allocation7 + $0x1c] sm:$0xf]
    %v516 = vld [vmem:[#allocation7 + $0x20] sm:$0xf]
    %v517 = vld [vmem:[#allocation7 + $0x24] sm:$0xf]
    %v518 = vld [vmem:[#allocation7 + $0x28] sm:$0xf]
    %v519 = vld [vmem:[#allocation7 + $0x2c] sm:$0xf]
    %v520 = vld [vmem:[#allocation7 + $0x30] sm:$0xf]
    %v521 = vld [vmem:[#allocation7 + $0x34] sm:$0xf]
    %v522 = vld [vmem:[#allocation7 + $0x38] sm:$0xf]
    %v523 = vld [vmem:[#allocation7 + $0x3c] sm:$0xf]
    %v524 = vld [vmem:[%s4] sm:$0x1]
    %v526 = vlaneseq
    %v527 = vshrl.u32 %v526, 7
    %v528 = vsub.s32 0, %v527
    %v529 = vrot.slane %v524, %v528
    %v539 = vunpack.c.l.b16 %v500
    %v540 = vunpack.c.l.b16 %v501
    %v541 = vunpack.c.l.b16 %v502
    %v542 = vunpack.c.l.b16 %v503
    %v543 = vunpack.c.l.b16 %v504
    %v544 = vunpack.c.l.b16 %v505
    %v545 = vunpack.c.l.b16 %v506
    %v546 = vunpack.c.l.b16 %v507
    %vm547 = vcmask 1041409
    %v548 = vsel %vm547, %v540, %v539
    %vm549 = vcmask 1042434
    %v550 = vsel %vm549, %v541, %v548
    %vm551 = vcmask 1043459
    %v552 = vsel %vm551, %v542, %v550
    %vm553 = vcmask 1044484
    %v554 = vsel %vm553, %v543, %v552
    %vm555 = vcmask 1045509
    %v556 = vsel %vm555, %v544, %v554
    %vm557 = vcmask 1046534
    %v558 = vsel %vm557, %v545, %v556
    %vm559 = vcmask 1047559
    %v560 = vsel %vm559, %v546, %v558
    %v561 = vpack.c.b16 %v560, %v560
    %v579 = vunpack.c.l.b16 %v508
    %v580 = vunpack.c.l.b16 %v509
    %v581 = vunpack.c.l.b16 %v510
    %v582 = vunpack.c.l.b16 %v511
    %v583 = vunpack.c.l.b16 %v512
    %v584 = vunpack.c.l.b16 %v513
    %v585 = vunpack.c.l.b16 %v514
    %v586 = vunpack.c.l.b16 %v515
    %v587 = vunpack.c.l.b16 %v516
    %v588 = vunpack.c.l.b16 %v517
    %v589 = vunpack.c.l.b16 %v518
    %v590 = vunpack.c.l.b16 %v519
    %v591 = vunpack.c.l.b16 %v520
    %v592 = vunpack.c.l.b16 %v521
    %v593 = vunpack.c.l.b16 %v522
    %v594 = vunpack.c.l.b16 %v523
    %v595 = vpack.c.b16 %v580, %v579
    %v596 = vpack.c.b16 %v582, %v581
    %v597 = vpack.c.b16 %v584, %v583
    %v598 = vpack.c.b16 %v586, %v585
    %v599 = vpack.c.b16 %v588, %v587
    %v600 = vpack.c.b16 %v590, %v589
    %v601 = vpack.c.b16 %v592, %v591
    %v602 = vpack.c.b16 %v594, %v593
    %611 = vmatprep.subr.bf16.mxu0 0
    %612 = vmatpush1.bf16.msra.mxu0 %v595
    %613 = vmatprep.subr.bf16.mxu0 0
    %614 = vmatpush1.bf16.msra.mxu0 %v596
    %615 = vmatprep.subr.bf16.mxu0 0
    %616 = vmatpush1.bf16.msra.mxu0 %v597
    %617 = vmatprep.subr.bf16.mxu0 0
    %618 = vmatpush1.bf16.msra.mxu0 %v598
    %619 = vmatprep.subr.bf16.mxu0 0
    %620 = vmatpush1.bf16.msra.mxu0 %v599
    %621 = vmatprep.subr.bf16.mxu0 0
    %622 = vmatpush1.bf16.msra.mxu0 %v600
    %623 = vmatprep.subr.bf16.mxu0 0
    %624 = vmatpush1.bf16.msra.mxu0 %v601
    %625 = vmatprep.subr.bf16.mxu0 0
    %626 = vmatpush1.bf16.msra.mxu0 %v602
    %627 = vmatprep.subr.bf16.mxu0 0
    %628 = vmatpush1.bf16.msra.mxu0 0
    %629 = vmatprep.subr.bf16.mxu0 0
    %630 = vmatpush1.bf16.msra.mxu0 0
    %631 = vmatprep.subr.bf16.mxu0 0
    %632 = vmatpush1.bf16.msra.mxu0 0
    %633 = vmatprep.subr.bf16.mxu0 0
    %634 = vmatpush1.bf16.msra.mxu0 0
    %635 = vmatprep.subr.bf16.mxu0 0
    %636 = vmatpush1.bf16.msra.mxu0 0
    %637 = vmatprep.subr.bf16.mxu0 0
    %638 = vmatpush1.bf16.msra.mxu0 0
    %639 = vmatprep.subr.bf16.mxu0 0
    %640 = vmatpush1.bf16.msra.mxu0 0
    %641 = vmatprep.subr.bf16.mxu0 0
    %642 = vmatpush1.bf16.msra.mxu0 0
    %643 = vmatprep.mubr.bf16.mxu0 0
    %644 = vmatmul.mubr.bf16.gmra.mrb[0].mxu0 %v561
    %v645 = vpop.f32.mrb[0].mxu0
    %v646 = vadd.f32 %v529, %v645
    %v647 = vpop.f32.mrb[0].mxu0
    %v648 = vpop.f32.mrb[0].mxu0
    %v649 = vpop.f32.mrb[0].mxu0
    %650 = vdwg.mxu0
    %v651 = vmax.f32 %v646, 0.0
    %v652 = vpack.c.bf16 %v651, %v651
    %v653 = vld [vmem:[#allocation8] sm:$0xf]
    %v654 = vld [vmem:[#allocation8 + $0x4] sm:$0xf]
    %v655 = vld [vmem:[#allocation8 + $0x8] sm:$0xf]
    %v656 = vld [vmem:[#allocation8 + $0xc] sm:$0xf]
    %v657 = vld [vmem:[#allocation8 + $0x10] sm:$0xf]
    %v658 = vld [vmem:[#allocation8 + $0x14] sm:$0xf]
    %v659 = vld [vmem:[#allocation8 + $0x18] sm:$0xf]
    %v660 = vld [vmem:[#allocation8 + $0x1c] sm:$0xf]
    %v661 = vld [vmem:[#allocation8 + $0x20] sm:$0xf]
    %v662 = vld [vmem:[#allocation8 + $0x24] sm:$0xf]
    %v663 = vld [vmem:[#allocation8 + $0x28] sm:$0xf]
    %v664 = vld [vmem:[#allocation8 + $0x2c] sm:$0xf]
    %v665 = vld [vmem:[#allocation8 + $0x30] sm:$0xf]
    %v666 = vld [vmem:[#allocation8 + $0x34] sm:$0xf]
    %v667 = vld [vmem:[#allocation8 + $0x38] sm:$0xf]
    %v668 = vld [vmem:[#allocation8 + $0x3c] sm:$0xf]
    %v669 = vld [vmem:[%s6] sm:$0x1]
    %v671 = vlaneseq
    %v672 = vshrl.u32 %v671, 7
    %v673 = vsub.s32 0, %v672
    %v674 = vrot.slane %v669, %v673
    %v692 = vunpack.c.l.b16 %v653
    %v693 = vunpack.c.l.b16 %v654
    %v694 = vunpack.c.l.b16 %v655
    %v695 = vunpack.c.l.b16 %v656
    %v696 = vunpack.c.l.b16 %v657
    %v697 = vunpack.c.l.b16 %v658
    %v698 = vunpack.c.l.b16 %v659
    %v699 = vunpack.c.l.b16 %v660
    %v700 = vunpack.c.l.b16 %v661
    %v701 = vunpack.c.l.b16 %v662
    %v702 = vunpack.c.l.b16 %v663
    %v703 = vunpack.c.l.b16 %v664
    %v704 = vunpack.c.l.b16 %v665
    %v705 = vunpack.c.l.b16 %v666
    %v706 = vunpack.c.l.b16 %v667
    %v707 = vunpack.c.l.b16 %v668
    %v708 = vpack.c.b16 %v693, %v692
    %v709 = vpack.c.b16 %v695, %v694
    %v710 = vpack.c.b16 %v697, %v696
    %v711 = vpack.c.b16 %v699, %v698
    %v712 = vpack.c.b16 %v701, %v700
    %v713 = vpack.c.b16 %v703, %v702
    %v714 = vpack.c.b16 %v705, %v704
    %v715 = vpack.c.b16 %v707, %v706
    %724 = vmatprep.subr.bf16.mxu0 0
    %725 = vmatpush1.bf16.msra.mxu0 %v708
    %726 = vmatprep.subr.bf16.mxu0 0
    %727 = vmatpush1.bf16.msra.mxu0 %v709
    %728 = vmatprep.subr.bf16.mxu0 0
    %729 = vmatpush1.bf16.msra.mxu0 %v710
    %730 = vmatprep.subr.bf16.mxu0 0
    %731 = vmatpush1.bf16.msra.mxu0 %v711
    %732 = vmatprep.subr.bf16.mxu0 0
    %733 = vmatpush1.bf16.msra.mxu0 %v712
    %734 = vmatprep.subr.bf16.mxu0 0
    %735 = vmatpush1.bf16.msra.mxu0 %v713
    %736 = vmatprep.subr.bf16.mxu0 0
    %737 = vmatpush1.bf16.msra.mxu0 %v714
    %738 = vmatprep.subr.bf16.mxu0 0
    %739 = vmatpush1.bf16.msra.mxu0 %v715
    %740 = vmatprep.subr.bf16.mxu0 0
    %741 = vmatpush1.bf16.msra.mxu0 0
    %742 = vmatprep.subr.bf16.mxu0 0
    %743 = vmatpush1.bf16.msra.mxu0 0
    %744 = vmatprep.subr.bf16.mxu0 0
    %745 = vmatpush1.bf16.msra.mxu0 0
    %746 = vmatprep.subr.bf16.mxu0 0
    %747 = vmatpush1.bf16.msra.mxu0 0
    %748 = vmatprep.subr.bf16.mxu0 0
    %749 = vmatpush1.bf16.msra.mxu0 0
    %750 = vmatprep.subr.bf16.mxu0 0
    %751 = vmatpush1.bf16.msra.mxu0 0
    %752 = vmatprep.subr.bf16.mxu0 0
    %753 = vmatpush1.bf16.msra.mxu0 0
    %754 = vmatprep.subr.bf16.mxu0 0
    %755 = vmatpush1.bf16.msra.mxu0 0
    %756 = vmatprep.mubr.bf16.mxu0 0
    %757 = vmatmul.mubr.bf16.gmra.mrb[0].mxu0 %v652
    %v758 = vpop.f32.mrb[0].mxu0
    %v759 = vadd.f32 %v674, %v758
    %v760 = vpop.f32.mrb[0].mxu0
    %v761 = vpop.f32.mrb[0].mxu0
    %v762 = vpop.f32.mrb[0].mxu0
    %763 = vdwg.mxu0
    %v764 = vmax.f32 %v759, 0.0
    %765 = vst [vmem:[#allocation10] sm:$0xff] %v764
    // Predicated region
    $region46: #{tpu_custom_call.1} parent=1 // pred_check
      _
    $region47: #{tpu_custom_call.1} parent=1 // pred_check_branch
      %767 = sbr.rel (0) target = $region49
    $region48: #{tpu_custom_call.1} parent=1 // pred_region
      %s769 = ssub.s32 128, 128
      %770 = vsyncadd [#allocation4], %s769
      %s772 = sshll.u32 [#allocation10], 4
      %s773 = int_to_ptr.vmem [resolvable:$true] %s772
      %775 = dma.vmem_to_hbm [thread:$0]  %s773, 128, %s7, [#allocation4]
    $region49: #{tpu_custom_call.1} parent=1 // pred_fallthru
      _
    // Predicated region
    $region50: #{tpu_custom_call.1} parent=1 // pred_check
      _
    $region51: #{tpu_custom_call.1} parent=1 // pred_check_branch
      %777 = sbr.rel (0) target = $region53
    $region52: #{tpu_custom_call.1} parent=1 // pred_region
      %778 = dma.done [#allocation4], 128
    $region53: #{tpu_custom_call.1} parent=1 // pred_fallthru
      _
    %779 = vsyncpa [#allocation3], 1
    %780 = vsyncpa [#allocation6], 1
    %781 = vsyncpa [#allocation9], 1
    %782 = vsyncpa [#allocation4], 1

</llo_original>
